<compile_context>
chip_gen: v7x
topology: tpu7x:2x2x1
jax: 0.10.0
libtpu: 0.0.40
codegen_flags: <defaults>
</compile_context>

<pallas_src>
import functools

import jax
import jax.numpy as jnp
from jax import lax
from jax.experimental import pallas as pl
from jax.experimental.pallas import tpu as pltpu


def _pad8(n):
    return ((n + 7) // 8) * 8


def _pad128(n):
    return ((n + 127) // 128) * 128


def _competitive_kernel(*refs, mode, n_solver_iters, use_mxu, flatten_c,
                        nA, nB, has_kt):
    if has_kt:
        at_ref, bt_ref, k_ref, kt_ref = refs[:4]
        af_ref, bf_ref, c_ref = refs[4:]
    else:
        at_ref, bt_ref, k_ref = refs[:3]
        kt_ref = None
        af_ref, bf_ref, c_ref = refs[3:]

    AT = at_ref[...]            # (bB, nA)
    BT = bt_ref[...]            # (bB, nB)
    K = k_ref[...]              # (nA, nB)  -- resident across the batch grid
    bB = AT.shape[0]

    need_b = mode in ("semiA", "compA", "comp")   # 1 + sum_i K[i,j]*AF[b,i]
    need_a = mode in ("semiB", "compB", "comp")   # 1 + sum_j K[i,j]*BF[b,j]

    denom_b = denom_a = None
    if use_mxu:
        if need_b:
            def denom_b(AF):
                return jnp.dot(AF, K, preferred_element_type=jnp.float32) + 1.0
        if need_a:
            KT = kt_ref[...]    # pre-transposed in the wrapper: no per-call K.T
            def denom_a(BF):
                return jnp.dot(BF, KT, preferred_element_type=jnp.float32) + 1.0
    else:
        # Shallow contractions: skip the MXU round-trip and run as rank-2 FMAs
        # on the VPU.  The K row/column broadcasts are hoisted out of the
        # fixed-point loop (JAX does not CSE broadcast_in_dim), so the solver
        # never rebuilds a (bB, nA, nB) rank-3 temp or a cross-sublane reduce.
        if need_b:
            k_rows = [jnp.broadcast_to(K[i:i + 1, :], (bB, nB))
                      for i in range(nA)]

            def denom_b(AF):
                d = jnp.ones((bB, nB), jnp.float32)
                for i in range(nA):
                    d = d + AF[:, i:i + 1] * k_rows[i]
                return d
        if need_a:
            KT = kt_ref[...]    # (nB, nA), pre-transposed in the wrapper
            kt_rows = [jnp.broadcast_to(KT[j:j + 1, :], (bB, nA))
                       for j in range(nB)]

            def denom_a(BF):
                d = jnp.ones((bB, nA), jnp.float32)
                for j in range(nB):
                    d = d + BF[:, j:j + 1] * kt_rows[j]
                return d

    if mode in ("semiA", "compA"):
        AF = AT
        BF = BT / denom_b(AF)
    elif mode in ("semiB", "compB"):
        BF = BT
        AF = AT / denom_a(BF)
    elif mode == "noncomp":
        AF, BF = AT, BT
    elif mode == "comp":
        # TODO(synk): solvers.torch_solve is not provided; the equilibrium is
        # approximated by a Picard fixed-point iteration (approx EUP
        # reciprocals inside the solver only), followed by the same exact
        # post-solve refinement steps as the PyTorch forward.
        def body(_, AF):
            BF_it = BT * pl.reciprocal(denom_b(AF), approx=True)
            return AT * pl.reciprocal(denom_a(BF_it), approx=True)

        # Iterations are serially dependent: full unroll exposes no ILP, so
        # keep the loop rolled on the MXU path and lightly unrolled on the VPU.
        AF = lax.fori_loop(0, n_solver_iters, body, AT,
                           unroll=(1 if use_mxu else 2))
        BF = BT / denom_b(AF)   # exact divides: match compA/compB accuracy
        AF = AT / denom_a(BF)
        BF = BT / denom_b(AF)
    else:
        raise ValueError(f"unsupported mode: {mode}")

    af_ref[...] = AF.astype(af_ref.dtype)
    bf_ref[...] = BF.astype(bf_ref.dtype)

    if flatten_c:
        # Lane-dense C: build the row-major flattened (bB, nA*nB) block by
        # lane concatenation -- no rank-3 temp and no in-kernel reshape.
        # C_flat[b, i*nB + j] = AF[b,i] * BF[b,j] * K[i,j]
        pieces = [AF[:, i:i + 1] * BF * K[i:i + 1, :] for i in range(nA)]
        c_ref[...] = jnp.concatenate(pieces, axis=1).astype(c_ref.dtype)
    else:
        # nB >= 128 (or very large nA): native layout is already lane-dense.
        c_ref[...] = (AF[:, :, None] * BF[:, None, :]
                      * K[None, :, :]).astype(c_ref.dtype)


def _vmem_capacity_bytes():
    try:
        cap = getattr(pltpu.get_tpu_info(), "vmem_capacity_bytes", None)
        if cap:
            return int(cap)
    except Exception:
        pass
    return 64 << 20     # conservative: v7x per-TensorCore VMEM


def _resident_spec(shape, nbytes_single):
    """K / K^T use a constant block index -> resident in VMEM.  When large,
    single-buffer them (no point double-buffering a constant block); matters
    most under v7x's 64 MiB per-TC VMEM."""
    index_map = lambda b: tuple(0 for _ in shape)
    if nbytes_single > (1 << 20):
        return pl.BlockSpec(shape, index_map, pipeline_mode=pl.Buffered(1))
    return pl.BlockSpec(shape, index_map)


def _plan_tiles(B, nA, nB, mode, c_elt_bytes):
    """(8,128)-padding-aware block sizing + v7x-safe scoped-VMEM limit."""
    lanA, lanB = _pad128(nA), _pad128(nB)
    use_mxu = min(nA, nB) >= 128
    flatten_c = (nB < 128) and (nA <= 32)
    need_a = mode in ("semiB", "compB", "comp")

    if flatten_c:
        c_row = c_elt_bytes * _pad128(nA * nB)
    else:
        c_row = c_elt_bytes * _pad8(nA) * _pad128(nB)

    # Double-buffered streaming blocks (AT/AF, BT/BF lane-padded to 128) + C.
    io_row = 4 * 4 * (lanA + lanB) + 2 * c_row
    # In-kernel temporaries: hoisted K broadcasts, FMA partials, C pieces.
    if use_mxu:
        tmp_row = 4 * 4 * (lanA + lanB)
    else:
        tmp_row = 4 * ((nA + 2) * lanB + (nB + 2) * lanA) + c_row
    per_row = io_row + tmp_row

    # Resident K (+ K^T), conservatively counted double-buffered when small.
    k_single = 4 * _pad8(nA) * _pad128(nB)
    kt_single = 4 * _pad8(nB) * _pad128(nA) if need_a else 0
    k_bytes = 2 * (k_single + kt_single)

    vmem_cap = _vmem_capacity_bytes()
    # Keep all live blocks comfortably inside the smallest per-TC VMEM (v7x).
    block_budget = min(16 << 20, vmem_cap // 5)
    budget = max(1 << 20, block_budget - k_bytes)

    bB = max(8, (budget // max(per_row, 1)) // 8 * 8)
    if B >= 16:
        # Guarantee >= 2 grid steps: lets dimension_semantics=("parallel",)
        # shard across v7x's two TensorCores and gives the pipeline something
        # to prefetch / write back behind compute.
        bB = min(bB, max(8, (((B + 1) // 2) // 8) * 8))
    bB = min(bB, _pad8(B))

    est_block_bytes = per_row * bB + k_bytes
    vmem_limit = int(min(max(32 << 20, 2 * est_block_bytes),
                         int(0.85 * vmem_cap)))
    return use_mxu, flatten_c, bB, vmem_limit, k_single, kt_single, need_a


def competitive_layer(AT, BT, K, *, mode="compA", n_solver_iters=30,
                      c_dtype=jnp.float32):
    """Pallas-backed CompetitiveLayer.forward.

    AT: (B, nA), BT: (B, nB), K: (nA, nB).
    Returns (AF, BF, C) shaped (B, nA, 1), (B, 1, nB), (B, nA, nB).
    """
    if mode not in ("comp", "semiA", "compA", "semiB", "compB", "noncomp"):
        raise ValueError(f"unsupported mode: {mode}")

    AT = jnp.asarray(AT, jnp.float32)
    BT = jnp.asarray(BT, jnp.float32)
    K = jnp.asarray(K, jnp.float32)
    B, nA = AT.shape
    nB = K.shape[1]

    (use_mxu, flatten_c, bB, vmem_limit,
     k_single, kt_single, need_a) = _plan_tiles(
        B, nA, nB, mode, jnp.dtype(c_dtype).itemsize)

    n_blocks = (B + bB - 1) // bB
    B_pad = n_blocks * bB
    if B_pad != B:
        # Zero-pad the batch (denominators stay 1, no div-by-zero); trimmed below.
        AT = jnp.pad(AT, ((0, B_pad - B), (0, 0)))
        BT = jnp.pad(BT, ((0, B_pad - B), (0, 0)))

    inputs = [AT, BT, K]
    in_specs = [
        pl.BlockSpec((bB, nA), lambda b: (b, 0)),
        pl.BlockSpec((bB, nB), lambda b: (b, 0)),
        _resident_spec((nA, nB), k_single),
    ]
    has_kt = need_a
    if has_kt:
        inputs.append(K.T)                       # XLA-side, computed once
        in_specs.append(_resident_spec((nB, nA), kt_single))

    c_shape = (B_pad, nA * nB) if flatten_c else (B_pad, nA, nB)
    c_block = (bB, nA * nB) if flatten_c else (bB, nA, nB)
    c_index = (lambda b: (b, 0)) if flatten_c else (lambda b: (b, 0, 0))

    kernel = functools.partial(
        _competitive_kernel, mode=mode, n_solver_iters=n_solver_iters,
        use_mxu=use_mxu, flatten_c=flatten_c, nA=nA, nB=nB, has_kt=has_kt)

    af, bf, c = pl.pallas_call(
        kernel,
        out_shape=(
            jax.ShapeDtypeStruct((B_pad, nA), jnp.float32),
            jax.ShapeDtypeStruct((B_pad, nB), jnp.float32),
            jax.ShapeDtypeStruct(c_shape, c_dtype),
        ),
        grid=(n_blocks,),
        in_specs=in_specs,
        out_specs=(
            pl.BlockSpec((bB, nA), lambda b: (b, 0)),
            pl.BlockSpec((bB, nB), lambda b: (b, 0)),
            pl.BlockSpec(c_block, c_index),
        ),
        compiler_params=pltpu.CompilerParams(
            dimension_semantics=("parallel",),
            vmem_limit_bytes=vmem_limit,
        ),
    )(*inputs)

    af = af[:B]
    bf = bf[:B]
    c = (c.reshape(B_pad, nA, nB) if flatten_c else c)[:B]   # free reshape
    return af[:, :, None], bf[:, None, :], c


def _reference(AT, BT, K, mode):
    """Pure-JAX replica of the PyTorch forward (for correctness check)."""
    AT3 = AT[:, :, None]          # (B, nA, 1)
    BT3 = BT[:, None, :]          # (B, 1, nB)
    if mode in ("semiA", "compA"):
        AF = AT3
        BF = BT3 / ((K * AF).sum(axis=1, keepdims=True) + 1.0)
    elif mode in ("semiB", "compB"):
        BF = BT3
        AF = AT3 / ((K * BF).sum(axis=2, keepdims=True) + 1.0)
    elif mode == "noncomp":
        AF, BF = AT3, BT3
    else:
        raise ValueError(mode)
    C = AF * BF * K
    return AF, BF, C


if __name__ == "__main__":
    key = jax.random.PRNGKey(0)
    k_k, k_at = jax.random.split(key)

    nA, nB = 4, 6
    # Deterministic parameter init mirroring __init__:
    #   K  = rand(nA, nB)  (constraint chain is identity for values in [0, 1))
    #   BT = ones(nB)
    K = jnp.clip(jax.random.uniform(k_k, (nA, nB), dtype=jnp.float32), 0.0, 1000.0)
    BT_param = jnp.ones((nB,), dtype=jnp.float32)

    ok = True
    # B=64 exercises a multi-step grid (>= 2 blocks); B=10 exercises the
    # batch-padding path (non-multiple-of-8 batch).
    for B in (64, 10):
        AT = jax.random.uniform(k_at, (B, nA), dtype=jnp.float32)
        BT = jnp.tile(BT_param[None, :], (B, 1))      # BT.repeat(len(AT), 1)
        for mode in ("compA", "semiA", "compB", "semiB", "noncomp"):
            AF, BF, C = competitive_layer(AT, BT, K, mode=mode)
            jax.block_until_ready((AF, BF, C))
            AF_ref, BF_ref, C_ref = _reference(AT, BT, K, mode)
            ok &= bool(jnp.allclose(AF, AF_ref, atol=1e-5, rtol=1e-5))
            ok &= bool(jnp.allclose(BF, BF_ref, atol=1e-5, rtol=1e-5))
            ok &= bool(jnp.allclose(C, C_ref, atol=1e-5, rtol=1e-5))

    # Also exercise the fixed-point "comp" path (no torch_solve reference).
    AF, BF, C = competitive_layer(AT, BT, K, mode="comp")
    jax.block_until_ready((AF, BF, C))
    ok &= bool(jnp.all(jnp.isfinite(C)))

    if not ok:
        raise SystemExit("mismatch vs reference")
    print("KERNEL_OK")
</pallas_src>

<mosaic_0001>
module attributes {stable_mosaic.version = 11 : i64} {
  func.func @_competitive_kernel(%arg0: i32, %arg1: memref<32x4xf32, #tpu.memory_space<vmem>>, %arg2: memref<32x6xf32, #tpu.memory_space<vmem>>, %arg3: memref<4x6xf32, #tpu.memory_space<vmem>>, %arg4: memref<32x4xf32, #tpu.memory_space<vmem>>, %arg5: memref<32x6xf32, #tpu.memory_space<vmem>>, %arg6: memref<32x24xf32, #tpu.memory_space<vmem>>) attributes {dimension_semantics = [#tpu.dimension_semantics<parallel>], iteration_bounds = array<i64: 2>, scalar_prefetch = 0 : i64, scratch_operands = 0 : i64, tpu.core_type = #tpu.core_type<tc>, window_params = [{transform_indices = @transform_0, window_bounds = array<i64: 32, 4>}, {transform_indices = @transform_1, window_bounds = array<i64: 32, 6>}, {pipeline_mode = #tpu.pipeline_mode<synchronous>, transform_indices = @transform_2, window_bounds = array<i64: 4, 6>}, {transform_indices = @transform_3, window_bounds = array<i64: 32, 4>}, {transform_indices = @transform_4, window_bounds = array<i64: 32, 6>}, {transform_indices = @transform_5, window_bounds = array<i64: 32, 24>}]} {
    %c0 = arith.constant 0 : index
    %c0_0 = arith.constant 0 : index
    %0 = vector.load %arg1[%c0, %c0_0] : memref<32x4xf32, #tpu.memory_space<vmem>>, vector<32x4xf32>
    %c0_1 = arith.constant 0 : index
    %c0_2 = arith.constant 0 : index
    %1 = vector.load %arg2[%c0_1, %c0_2] : memref<32x6xf32, #tpu.memory_space<vmem>>, vector<32x6xf32>
    %c0_3 = arith.constant 0 : index
    %c0_4 = arith.constant 0 : index
    %2 = vector.load %arg3[%c0_3, %c0_4] : memref<4x6xf32, #tpu.memory_space<vmem>>, vector<4x6xf32>
    %3 = vector.extract_strided_slice %2 {offsets = [0, 0], sizes = [1, 6], strides = [1, 1]} : vector<4x6xf32> to vector<1x6xf32>
    %4 = vector.shape_cast %3 : vector<1x6xf32> to vector<1x6xf32>
    %5 = vector.broadcast %4 : vector<1x6xf32> to vector<32x6xf32>
    %6 = vector.extract_strided_slice %2 {offsets = [1, 0], sizes = [1, 6], strides = [1, 1]} : vector<4x6xf32> to vector<1x6xf32>
    %7 = vector.shape_cast %6 : vector<1x6xf32> to vector<1x6xf32>
    %8 = vector.broadcast %7 : vector<1x6xf32> to vector<32x6xf32>
    %9 = vector.extract_strided_slice %2 {offsets = [2, 0], sizes = [1, 6], strides = [1, 1]} : vector<4x6xf32> to vector<1x6xf32>
    %10 = vector.shape_cast %9 : vector<1x6xf32> to vector<1x6xf32>
    %11 = vector.broadcast %10 : vector<1x6xf32> to vector<32x6xf32>
    %12 = vector.extract_strided_slice %2 {offsets = [3, 0], sizes = [1, 6], strides = [1, 1]} : vector<4x6xf32> to vector<1x6xf32>
    %13 = vector.shape_cast %12 : vector<1x6xf32> to vector<1x6xf32>
    %14 = vector.broadcast %13 : vector<1x6xf32> to vector<32x6xf32>
    %cst = arith.constant 1.000000e+00 : f32
    %15 = vector.broadcast %cst : f32 to vector<32x6xf32>
    %16 = vector.extract_strided_slice %0 {offsets = [0, 0], sizes = [32, 1], strides = [1, 1]} : vector<32x4xf32> to vector<32x1xf32>
    %17 = vector.broadcast %16 : vector<32x1xf32> to vector<32x6xf32>
    %18 = arith.mulf %17, %5 : vector<32x6xf32>
    %19 = arith.addf %15, %18 : vector<32x6xf32>
    %20 = vector.extract_strided_slice %0 {offsets = [0, 1], sizes = [32, 1], strides = [1, 1]} : vector<32x4xf32> to vector<32x1xf32>
    %21 = vector.broadcast %20 : vector<32x1xf32> to vector<32x6xf32>
    %22 = arith.mulf %21, %8 : vector<32x6xf32>
    %23 = arith.addf %19, %22 : vector<32x6xf32>
    %24 = vector.extract_strided_slice %0 {offsets = [0, 2], sizes = [32, 1], strides = [1, 1]} : vector<32x4xf32> to vector<32x1xf32>
    %25 = vector.broadcast %24 : vector<32x1xf32> to vector<32x6xf32>
    %26 = arith.mulf %25, %11 : vector<32x6xf32>
    %27 = arith.addf %23, %26 : vector<32x6xf32>
    %28 = vector.extract_strided_slice %0 {offsets = [0, 3], sizes = [32, 1], strides = [1, 1]} : vector<32x4xf32> to vector<32x1xf32>
    %29 = vector.broadcast %28 : vector<32x1xf32> to vector<32x6xf32>
    %30 = arith.mulf %29, %14 : vector<32x6xf32>
    %31 = arith.addf %27, %30 : vector<32x6xf32>
    %32 = arith.divf %1, %31 : vector<32x6xf32>
    %c0_5 = arith.constant 0 : index
    %c0_6 = arith.constant 0 : index
    %33 = vector.load %arg4[%c0_5, %c0_6] : memref<32x4xf32, #tpu.memory_space<vmem>>, vector<32x4xf32>
    tpu.vector_store %arg4[%c0_5, %c0_6], %0 {strides = array<i32>} : memref<32x4xf32, #tpu.memory_space<vmem>>, vector<32x4xf32>,
    %c0_7 = arith.constant 0 : index
    %c0_8 = arith.constant 0 : index
    %34 = vector.load %arg5[%c0_7, %c0_8] : memref<32x6xf32, #tpu.memory_space<vmem>>, vector<32x6xf32>
    tpu.vector_store %arg5[%c0_7, %c0_8], %32 {strides = array<i32>} : memref<32x6xf32, #tpu.memory_space<vmem>>, vector<32x6xf32>,
    %35 = vector.extract_strided_slice %0 {offsets = [0, 0], sizes = [32, 1], strides = [1, 1]} : vector<32x4xf32> to vector<32x1xf32>
    %36 = vector.broadcast %35 : vector<32x1xf32> to vector<32x6xf32>
    %37 = arith.mulf %36, %32 : vector<32x6xf32>
    %38 = vector.extract_strided_slice %2 {offsets = [0, 0], sizes = [1, 6], strides = [1, 1]} : vector<4x6xf32> to vector<1x6xf32>
    %39 = vector.broadcast %38 : vector<1x6xf32> to vector<32x6xf32>
    %40 = arith.mulf %37, %39 : vector<32x6xf32>
    %41 = vector.extract_strided_slice %0 {offsets = [0, 1], sizes = [32, 1], strides = [1, 1]} : vector<32x4xf32> to vector<32x1xf32>
    %42 = vector.broadcast %41 : vector<32x1xf32> to vector<32x6xf32>
    %43 = arith.mulf %42, %32 : vector<32x6xf32>
    %44 = vector.extract_strided_slice %2 {offsets = [1, 0], sizes = [1, 6], strides = [1, 1]} : vector<4x6xf32> to vector<1x6xf32>
    %45 = vector.broadcast %44 : vector<1x6xf32> to vector<32x6xf32>
    %46 = arith.mulf %43, %45 : vector<32x6xf32>
    %47 = vector.extract_strided_slice %0 {offsets = [0, 2], sizes = [32, 1], strides = [1, 1]} : vector<32x4xf32> to vector<32x1xf32>
    %48 = vector.broadcast %47 : vector<32x1xf32> to vector<32x6xf32>
    %49 = arith.mulf %48, %32 : vector<32x6xf32>
    %50 = vector.extract_strided_slice %2 {offsets = [2, 0], sizes = [1, 6], strides = [1, 1]} : vector<4x6xf32> to vector<1x6xf32>
    %51 = vector.broadcast %50 : vector<1x6xf32> to vector<32x6xf32>
    %52 = arith.mulf %49, %51 : vector<32x6xf32>
    %53 = vector.extract_strided_slice %0 {offsets = [0, 3], sizes = [32, 1], strides = [1, 1]} : vector<32x4xf32> to vector<32x1xf32>
    %54 = vector.broadcast %53 : vector<32x1xf32> to vector<32x6xf32>
    %55 = arith.mulf %54, %32 : vector<32x6xf32>
    %56 = vector.extract_strided_slice %2 {offsets = [3, 0], sizes = [1, 6], strides = [1, 1]} : vector<4x6xf32> to vector<1x6xf32>
    %57 = vector.broadcast %56 : vector<1x6xf32> to vector<32x6xf32>
    %58 = arith.mulf %55, %57 : vector<32x6xf32>
    %59 = tpu.concatenate %40, %46, %52, %58 in 1 : vector<32x6xf32>, vector<32x6xf32>, vector<32x6xf32>, vector<32x6xf32> -> vector<32x24xf32>
    %c0_9 = arith.constant 0 : index
    %c0_10 = arith.constant 0 : index
    %60 = vector.load %arg6[%c0_9, %c0_10] : memref<32x24xf32, #tpu.memory_space<vmem>>, vector<32x24xf32>
    tpu.vector_store %arg6[%c0_9, %c0_10], %59 {strides = array<i32>} : memref<32x24xf32, #tpu.memory_space<vmem>>, vector<32x24xf32>,
    return
  }
  func.func @transform_0(%arg0: i32) -> (i32, i32) {
    %c0_i32 = arith.constant 0 : i32
    %c0_i32_0 = arith.constant 0 : i32
    return %arg0, %c0_i32 : i32, i32
  }
  func.func @transform_1(%arg0: i32) -> (i32, i32) {
    %c0_i32 = arith.constant 0 : i32
    %c0_i32_0 = arith.constant 0 : i32
    return %arg0, %c0_i32 : i32, i32
  }
  func.func @transform_2(%arg0: i32) -> (i32, i32) {
    %c0_i32 = arith.constant 0 : i32
    %c0_i32_0 = arith.constant 0 : i32
    %c0_i32_1 = arith.constant 0 : i32
    return %c0_i32, %c0_i32_0 : i32, i32
  }
  func.func @transform_3(%arg0: i32) -> (i32, i32) {
    %c0_i32 = arith.constant 0 : i32
    %c0_i32_0 = arith.constant 0 : i32
    return %arg0, %c0_i32 : i32, i32
  }
  func.func @transform_4(%arg0: i32) -> (i32, i32) {
    %c0_i32 = arith.constant 0 : i32
    %c0_i32_0 = arith.constant 0 : i32
    return %arg0, %c0_i32 : i32, i32
  }
  func.func @transform_5(%arg0: i32) -> (i32, i32) {
    %c0_i32 = arith.constant 0 : i32
    %c0_i32_0 = arith.constant 0 : i32
    return %arg0, %c0_i32 : i32, i32
  }
}

</mosaic_0001>

<llo_original>
// kernel: tpu_custom_call.1
$region0: #{tpu_custom_call.1}
  #allocation0 [shape = 'u32[]', space=smem, size = 0x4, offset = 0x4, fixed_abs, tag = 'smem constant byte address 0x4 - core index']
  #allocation1 [shape = 'u32[144,128]{1,0:T(1,128)}', space=vmem, size = 0x12000, scoped, tag = 'internal scratch']
  %s0 = inlined_call_operand.vmem [shape: f32[64,4], index: 0, kind: input, shape index: {}]
  %s1 = inlined_call_operand.vmem [shape: f32[64,6], index: 1, kind: input, shape index: {}]
  %s2 = inlined_call_operand.vmem [shape: f32[4,6], index: 2, kind: input, shape index: {}]
  %s3 = inlined_call_operand.vmem [shape: f32[64,4], index: 3, kind: output, shape index: {0}]
  %s4 = inlined_call_operand.vmem [shape: f32[64,6], index: 4, kind: output, shape index: {1}]
  %s5 = inlined_call_operand.vmem [shape: f32[64,24], index: 5, kind: output, shape index: {2}]
  %6 = xla_tuple %s3, %s4, %s5
  %s7 = sld [smem:[#allocation0]]
  $region61: #{tpu_custom_call.1} parent=0
    _
  %s9 = ssub.s32 1, %s7
  %s10 = scalar_select 0, %s9, %s7
  loop: start=0, step=1, limit=4
  $region2: #{tpu_custom_call.1} parent=0 // loop_pre_header
    _
  $region3: #{tpu_custom_call.1} parent=0 // loop_header
    %s12 = sphi 0, %s16
    %p13 = scmp.ge.s32.totalorder %s12, 4
    %s22 = sphi 0, %s24
    %s25 = sphi 0, %s22
    %s26 = sphi 0, %s25
    %s42 = sphi 0, %s26
    %s48 = sphi 0, %s50
    %s51 = sphi 0, %s48
    %s52 = sphi 0, %s51
    %s68 = sphi 0, %s52
    %s72 = sphi 0, %s72
    %s74 = sphi 0, %s72
    %s75 = sphi 0, %s74
    %s89 = sphi 0, %s75
    %s95 = sphi 0, %s97
    %s98 = sphi 0, %s95
    %s99 = sphi 0, %s98
    %s115 = sphi 0, %s99
    %s121 = sphi 0, %s123
    %s124 = sphi 0, %s121
    %s125 = sphi 0, %s124
    %s141 = sphi 0, %s125
    %s147 = sphi 0, %s149
    %s150 = sphi 0, %s147
    %s151 = sphi 0, %s150
    %s167 = sphi 0, %s151
  $region4: #{tpu_custom_call.1} parent=0 // loop_header_branch
    %15 = sbr.rel (%p13) target = $region8
  $region5: #{tpu_custom_call.1} parent=0 // loop_body
    %s17 = ssub.s32 %s12, 1
    %s18 = ssub.s32 %s12, 2
    %s19 = sadd.s32 %s12, 1
    %s20 = ssub.s32 %s12, %s19
    %p21 = scmp.eq.s32.totalorder %s20, 0
    %s23 = sadd.s32 %s22, 1
    %s24 = scalar_select %p21, %s22, %s23
    %p27 = pneg %p21
    %p28 = scmp.eq.s32.totalorder %s12, 1
    %p29 = por %p27, %p28
    %p30 = scmp.ne.s32.totalorder %s22, %s25
    %p31 = scmp.eq.s32.totalorder %s12, 0
    %p32 = por %p30, %p31
    %p33 = scmp.ne.s32.totalorder %s22, %s25
    %p34 = scmp.eq.s32.totalorder %s17, 1
    %p35 = por %p33, %p34
    %p36 = scmp.ne.s32.totalorder %s25, %s26
    %p37 = scmp.eq.s32.totalorder %s17, 0
    %p38 = por %p36, %p37
    %p39 = scmp.ne.s32.totalorder %s25, %s26
    %p40 = scmp.eq.s32.totalorder %s18, 1
    %p41 = por %p39, %p40
    %p43 = scmp.ne.s32.totalorder %s26, %s42
    %p44 = scmp.eq.s32.totalorder %s18, 0
    %p45 = por %p43, %p44
    %s46 = ssub.s32 %s12, %s19
    %p47 = scmp.eq.s32.totalorder %s46, 0
    %s49 = sadd.s32 %s48, 1
    %s50 = scalar_select %p47, %s48, %s49
    %p53 = pneg %p47
    %p54 = scmp.eq.s32.totalorder %s12, 1
    %p55 = por %p53, %p54
    %p56 = scmp.ne.s32.totalorder %s48, %s51
    %p57 = scmp.eq.s32.totalorder %s12, 0
    %p58 = por %p56, %p57
    %p59 = scmp.ne.s32.totalorder %s48, %s51
    %p60 = scmp.eq.s32.totalorder %s17, 1
    %p61 = por %p59, %p60
    %p62 = scmp.ne.s32.totalorder %s51, %s52
    %p63 = scmp.eq.s32.totalorder %s17, 0
    %p64 = por %p62, %p63
    %p65 = scmp.ne.s32.totalorder %s51, %s52
    %p66 = scmp.eq.s32.totalorder %s18, 1
    %p67 = por %p65, %p66
    %p69 = scmp.ne.s32.totalorder %s52, %s68
    %p70 = scmp.eq.s32.totalorder %s18, 0
    %p71 = por %p69, %p70
    %s73 = sadd.s32 %s72, 1
    %p76 = scmp.eq.s32.totalorder %s12, 1
    %p77 = scmp.ne.s32.totalorder %s72, %s74
    %p78 = scmp.eq.s32.totalorder %s12, 0
    %p79 = por %p77, %p78
    %p80 = scmp.ne.s32.totalorder %s72, %s74
    %p81 = scmp.eq.s32.totalorder %s17, 1
    %p82 = por %p80, %p81
    %p83 = scmp.ne.s32.totalorder %s74, %s75
    %p84 = scmp.eq.s32.totalorder %s17, 0
    %p85 = por %p83, %p84
    %p86 = scmp.ne.s32.totalorder %s74, %s75
    %p87 = scmp.eq.s32.totalorder %s18, 1
    %p88 = por %p86, %p87
    %p90 = scmp.ne.s32.totalorder %s75, %s89
    %p91 = scmp.eq.s32.totalorder %s18, 0
    %p92 = por %p90, %p91
    %s93 = ssub.s32 %s12, %s19
    %p94 = scmp.eq.s32.totalorder %s93, 0
    %s96 = sadd.s32 %s95, 1
    %s97 = scalar_select %p94, %s95, %s96
    %p100 = pneg %p94
    %p101 = scmp.eq.s32.totalorder %s12, 1
    %p102 = por %p100, %p101
    %p103 = scmp.ne.s32.totalorder %s95, %s98
    %p104 = scmp.eq.s32.totalorder %s12, 0
    %p105 = por %p103, %p104
    %p106 = scmp.ne.s32.totalorder %s95, %s98
    %p107 = scmp.eq.s32.totalorder %s17, 1
    %p108 = por %p106, %p107
    %p109 = scmp.ne.s32.totalorder %s98, %s99
    %p110 = scmp.eq.s32.totalorder %s17, 0
    %p111 = por %p109, %p110
    %p112 = scmp.ne.s32.totalorder %s98, %s99
    %p113 = scmp.eq.s32.totalorder %s18, 1
    %p114 = por %p112, %p113
    %p116 = scmp.ne.s32.totalorder %s99, %s115
    %p117 = scmp.eq.s32.totalorder %s18, 0
    %p118 = por %p116, %p117
    %s119 = ssub.s32 %s12, %s19
    %p120 = scmp.eq.s32.totalorder %s119, 0
    %s122 = sadd.s32 %s121, 1
    %s123 = scalar_select %p120, %s121, %s122
    %p126 = pneg %p120
    %p127 = scmp.eq.s32.totalorder %s12, 1
    %p128 = por %p126, %p127
    %p129 = scmp.ne.s32.totalorder %s121, %s124
    %p130 = scmp.eq.s32.totalorder %s12, 0
    %p131 = por %p129, %p130
    %p132 = scmp.ne.s32.totalorder %s121, %s124
    %p133 = scmp.eq.s32.totalorder %s17, 1
    %p134 = por %p132, %p133
    %p135 = scmp.ne.s32.totalorder %s124, %s125
    %p136 = scmp.eq.s32.totalorder %s17, 0
    %p137 = por %p135, %p136
    %p138 = scmp.ne.s32.totalorder %s124, %s125
    %p139 = scmp.eq.s32.totalorder %s18, 1
    %p140 = por %p138, %p139
    %p142 = scmp.ne.s32.totalorder %s125, %s141
    %p143 = scmp.eq.s32.totalorder %s18, 0
    %p144 = por %p142, %p143
    %s145 = ssub.s32 %s12, %s19
    %p146 = scmp.eq.s32.totalorder %s145, 0
    %s148 = sadd.s32 %s147, 1
    %s149 = scalar_select %p146, %s147, %s148
    %p152 = pneg %p146
    %p153 = scmp.eq.s32.totalorder %s12, 1
    %p154 = por %p152, %p153
    %p155 = scmp.ne.s32.totalorder %s147, %s150
    %p156 = scmp.eq.s32.totalorder %s12, 0
    %p157 = por %p155, %p156
    %p158 = scmp.ne.s32.totalorder %s147, %s150
    %p159 = scmp.eq.s32.totalorder %s17, 1
    %p160 = por %p158, %p159
    %p161 = scmp.ne.s32.totalorder %s150, %s151
    %p162 = scmp.eq.s32.totalorder %s17, 0
    %p163 = por %p161, %p162
    %p164 = scmp.ne.s32.totalorder %s150, %s151
    %p165 = scmp.eq.s32.totalorder %s18, 1
    %p166 = por %p164, %p165
    %p168 = scmp.ne.s32.totalorder %s151, %s167
    %p169 = scmp.eq.s32.totalorder %s18, 0
    %p170 = por %p168, %p169
    %p171 = scmp.le.s32.totalorder 1, %s12
    %p172 = scmp.lt.s32.totalorder %s12, 3
    %p173 = pnand %p171, %p172
    %p174 = pneg %p173
    // Predicated region
    $region9: #{tpu_custom_call.1} parent=5 // pred_check
      _
    $region10: #{tpu_custom_call.1} parent=5 // pred_check_branch
      %176 = sbr.rel (%p173) target = $region12
    $region11: #{tpu_custom_call.1} parent=5 // pred_region
      %s177 = ssub.s32 %s12, 1
      // Predicated region
      $region13: #{tpu_custom_call.1} parent=11 // pred_check
        %p178 = pneg %p85
      $region14: #{tpu_custom_call.1} parent=11 // pred_check_branch
        %180 = sbr.rel (%p178) target = $region16
      $region15: #{tpu_custom_call.1} parent=11 // pred_region
        _
      $region16: #{tpu_custom_call.1} parent=11 // pred_fallthru
        _
    $region12: #{tpu_custom_call.1} parent=5 // pred_fallthru
      _
    %p181 = scmp.lt.s32.totalorder %s12, 2
    // Predicated region
    $region17: #{tpu_custom_call.1} parent=5 // pred_check
      %p182 = pneg %p181
    $region18: #{tpu_custom_call.1} parent=5 // pred_check_branch
      %184 = sbr.rel (%p182) target = $region20
    $region19: #{tpu_custom_call.1} parent=5 // pred_region
      // Predicated region
      $region21: #{tpu_custom_call.1} parent=19 // pred_check
        %p185 = pneg %p32
      $region22: #{tpu_custom_call.1} parent=19 // pred_check_branch
        %187 = sbr.rel (%p185) target = $region24
      $region23: #{tpu_custom_call.1} parent=19 // pred_region
        %s188 = smul.u32 4, %s12
        %p189 = scmp.lt.s32.totalorder %s188, 7
        %s190 = scalar_select %p189, %s188, 7
        %s191 = smul.addr %s190, 8
        %s192 = scalar_lea.vmem %s0, %s191
        %s193 = smul.u32 4, %s12
      $region24: #{tpu_custom_call.1} parent=19 // pred_fallthru
        _
      // Predicated region
      $region25: #{tpu_custom_call.1} parent=19 // pred_check
        %p194 = pneg %p58
      $region26: #{tpu_custom_call.1} parent=19 // pred_check_branch
        %196 = sbr.rel (%p194) target = $region28
      $region27: #{tpu_custom_call.1} parent=19 // pred_region
        %s197 = smul.u32 4, %s12
        %p198 = scmp.lt.s32.totalorder %s197, 7
        %s199 = scalar_select %p198, %s197, 7
        %s200 = smul.addr %s199, 8
        %s201 = scalar_lea.vmem %s1, %s200
        %s202 = smul.u32 4, %s12
      $region28: #{tpu_custom_call.1} parent=19 // pred_fallthru
        _
    $region20: #{tpu_custom_call.1} parent=5 // pred_fallthru
      _
    %p203 = scmp.le.s32.totalorder 1, %s12
    %p204 = scmp.lt.s32.totalorder %s12, 3
    %p205 = pnand %p203, %p204
    %p206 = pneg %p205
    // Predicated region
    $region29: #{tpu_custom_call.1} parent=5 // pred_check
      _
    $region30: #{tpu_custom_call.1} parent=5 // pred_check_branch
      %208 = sbr.rel (%p205) target = $region32
    $region31: #{tpu_custom_call.1} parent=5 // pred_region
      %s209 = ssub.s32 %s12, 1
      %s210 = smul.u32 4, %s17
      %p211 = scmp.lt.s32.totalorder %s210, 7
      %s212 = scalar_select %p211, %s210, 7
      %s213 = smul.addr %s212, 8
      %s214 = scalar_lea.vmem %s0, %s213
      %p215 = pneg %p38
      %p216 = pneg %p35
      %s217 = smul.u32 4, %s17
      %p218 = scmp.lt.s32.totalorder %s217, 7
      %s219 = scalar_select %p218, %s217, 7
      %s220 = smul.addr %s219, 8
      %s221 = scalar_lea.vmem %s1, %s220
      %p222 = pneg %p64
      %p223 = pneg %p61
      %p224 = pneg %p85
      %p225 = pneg %p82
      %p226 = pneg %p111
      %p227 = pneg %p108
      %s228 = smul.u32 4, %s17
      %p229 = scmp.lt.s32.totalorder %s228, 7
      %s230 = scalar_select %p229, %s228, 7
      %s231 = smul.addr %s230, 8
      %s232 = scalar_lea.vmem %s3, %s231
      %p233 = pneg %p137
      %p234 = pneg %p134
      %s235 = smul.u32 4, %s17
      %p236 = scmp.lt.s32.totalorder %s235, 7
      %s237 = scalar_select %p236, %s235, 7
      %s238 = smul.addr %s237, 8
      %s239 = scalar_lea.vmem %s4, %s238
      %p240 = pneg %p163
      %p241 = pneg %p160
      %s242 = smul.u32 4, %s17
      %p243 = scmp.lt.s32.totalorder %s242, 7
      %s244 = scalar_select %p243, %s242, 7
      %s245 = smul.addr %s244, 8
      %s246 = scalar_lea.vmem %s5, %s245
      %s247 = smul.u32 4, %s17
      %p248 = scmp.lt.s32.totalorder %s247, 7
      %s249 = scalar_select %p248, %s247, 7
      %s250 = smul.addr %s249, 8
      %s251 = scalar_lea.vmem %s0, %s250
      %s252 = smul.u32 4, %s17
      %s253 = smul.u32 4, %s17
      %p254 = scmp.lt.s32.totalorder %s253, 7
      %s255 = scalar_select %p254, %s253, 7
      %s256 = smul.addr %s255, 8
      %s257 = scalar_lea.vmem %s1, %s256
      %s258 = smul.u32 4, %s17
      %s259 = smul.u32 4, %s17
      %p260 = scmp.lt.s32.totalorder %s259, 7
      %s261 = scalar_select %p260, %s259, 7
      %s262 = smul.addr %s261, 8
      %s263 = scalar_lea.vmem %s3, %s262
      %s264 = smul.u32 4, %s17
      %s265 = smul.u32 4, %s17
      %p266 = scmp.lt.s32.totalorder %s265, 7
      %s267 = scalar_select %p266, %s265, 7
      %s268 = smul.addr %s267, 8
      %s269 = scalar_lea.vmem %s4, %s268
      %s270 = smul.u32 4, %s17
      %s271 = smul.u32 4, %s17
      %p272 = scmp.lt.s32.totalorder %s271, 7
      %s273 = scalar_select %p272, %s271, 7
      %s274 = smul.addr %s273, 8
      %s275 = scalar_lea.vmem %s5, %s274
      %s276 = smul.u32 4, %s17
      %v277 = vld [vmem:[%s251] sm:$0xff]
      %v278 = vld [vmem:[%s251 + $0x8] sm:$0xff]
      %v279 = vld [vmem:[%s251 + $0x10] sm:$0xff]
      %v280 = vld [vmem:[%s251 + $0x18] sm:$0xff]
      %v281 = vld [vmem:[%s257] sm:$0xff]
      %v282 = vld [vmem:[%s257 + $0x8] sm:$0xff]
      %v283 = vld [vmem:[%s257 + $0x10] sm:$0xff]
      %v284 = vld [vmem:[%s257 + $0x18] sm:$0xff]
      %v285 = vld [vmem:[%s2] sm:$0xf]
      %v286 = vlaneseq
      %v287 = vshrl.u32 %v286, 7
      %v288 = vsub.s32 0, %v287
      %v289 = vrot.slane %v285, %v288
      %v290 = vlaneseq
      %v291 = vshrl.u32 %v290, 7
      %v292 = vsub.s32 1, %v291
      %v293 = vrot.slane %v285, %v292
      %v294 = vlaneseq
      %v295 = vshrl.u32 %v294, 7
      %v296 = vsub.s32 2, %v295
      %v297 = vrot.slane %v285, %v296
      %v298 = vlaneseq
      %v299 = vshrl.u32 %v298, 7
      %v300 = vsub.s32 3, %v299
      %v301 = vrot.slane %v285, %v300
      %303 = vset.pattern.permute.xlu0 0
      %304 = vperm.xlu0 %303, %v277
      %v305 = vpop.permute.xlu0 %304
      %308 = vset.pattern.permute.xlu0 0
      %309 = vperm.xlu0 %308, %v278
      %v310 = vpop.permute.xlu0 %309
      %313 = vset.pattern.permute.xlu0 0
      %314 = vperm.xlu0 %313, %v279
      %v315 = vpop.permute.xlu0 %314
      %318 = vset.pattern.permute.xlu0 0
      %319 = vperm.xlu0 %318, %v280
      %v320 = vpop.permute.xlu0 %319
      %v322 = vmul.f32 %v305, %v289
      %v323 = vmul.f32 %v310, %v289
      %v324 = vmul.f32 %v315, %v289
      %v325 = vmul.f32 %v320, %v289
      %v326 = vadd.f32 %v322, 1.0
      %v327 = vadd.f32 %v323, 1.0
      %v328 = vadd.f32 %v324, 1.0
      %v329 = vadd.f32 %v325, 1.0
      %330 = vset.pattern.permute.xlu0 1
      %331 = vperm.xlu0 %330, %v277
      %v332 = vpop.permute.xlu0 %331
      %334 = vset.pattern.permute.xlu0 1
      %335 = vperm.xlu0 %334, %v278
      %v336 = vpop.permute.xlu0 %335
      %338 = vset.pattern.permute.xlu0 1
      %339 = vperm.xlu0 %338, %v279
      %v340 = vpop.permute.xlu0 %339
      %342 = vset.pattern.permute.xlu0 1
      %343 = vperm.xlu0 %342, %v280
      %v344 = vpop.permute.xlu0 %343
      %v346 = vmul.f32 %v332, %v293
      %v347 = vmul.f32 %v336, %v293
      %v348 = vmul.f32 %v340, %v293
      %v349 = vmul.f32 %v344, %v293
      %v350 = vadd.f32 %v326, %v346
      %v351 = vadd.f32 %v327, %v347
      %v352 = vadd.f32 %v328, %v348
      %v353 = vadd.f32 %v329, %v349
      %354 = vset.pattern.permute.xlu0 2
      %355 = vperm.xlu0 %354, %v277
      %v356 = vpop.permute.xlu0 %355
      %358 = vset.pattern.permute.xlu0 2
      %359 = vperm.xlu0 %358, %v278
      %v360 = vpop.permute.xlu0 %359
      %362 = vset.pattern.permute.xlu0 2
      %363 = vperm.xlu0 %362, %v279
      %v364 = vpop.permute.xlu0 %363
      %366 = vset.pattern.permute.xlu0 2
      %367 = vperm.xlu0 %366, %v280
      %v368 = vpop.permute.xlu0 %367
      %v370 = vmul.f32 %v356, %v297
      %v371 = vmul.f32 %v360, %v297
      %v372 = vmul.f32 %v364, %v297
      %v373 = vmul.f32 %v368, %v297
      %v374 = vadd.f32 %v350, %v370
      %v375 = vadd.f32 %v351, %v371
      %v376 = vadd.f32 %v352, %v372
      %v377 = vadd.f32 %v353, %v373
      %378 = vset.pattern.permute.xlu0 3
      %379 = vperm.xlu0 %378, %v277
      %v380 = vpop.permute.xlu0 %379
      %382 = vset.pattern.permute.xlu0 3
      %383 = vperm.xlu0 %382, %v278
      %v384 = vpop.permute.xlu0 %383
      %386 = vset.pattern.permute.xlu0 3
      %387 = vperm.xlu0 %386, %v279
      %v388 = vpop.permute.xlu0 %387
      %390 = vset.pattern.permute.xlu0 3
      %391 = vperm.xlu0 %390, %v280
      %v392 = vpop.permute.xlu0 %391
      %v394 = vmul.f32 %v380, %v301
      %v395 = vmul.f32 %v384, %v301
      %v396 = vmul.f32 %v388, %v301
      %v397 = vmul.f32 %v392, %v301
      %v398 = vadd.f32 %v374, %v394
      %v399 = vadd.f32 %v375, %v395
      %v400 = vadd.f32 %v376, %v396
      %v401 = vadd.f32 %v377, %v397
      %v402 = vrcp.pop %v398
      %v403 = vmul.f32 %v281, %v402
      %v404 = vrcp.pop %v399
      %v405 = vmul.f32 %v282, %v404
      %v406 = vrcp.pop %v400
      %v407 = vmul.f32 %v283, %v406
      %v408 = vrcp.pop %v401
      %v409 = vmul.f32 %v284, %v408
      %vm410 = vcmask 31744
      %411 = vst.msk [vmem:[%s263] sm:$0xff] %vm410, %v277
      %412 = vst.msk [vmem:[%s263 + $0x8] sm:$0xff] %vm410, %v278
      %413 = vst.msk [vmem:[%s263 + $0x10] sm:$0xff] %vm410, %v279
      %414 = vst.msk [vmem:[%s263 + $0x18] sm:$0xff] %vm410, %v280
      %vm415 = vcmask 48128
      %416 = vst.msk [vmem:[%s269] sm:$0xff] %vm415, %v403
      %417 = vst.msk [vmem:[%s269 + $0x8] sm:$0xff] %vm415, %v405
      %418 = vst.msk [vmem:[%s269 + $0x10] sm:$0xff] %vm415, %v407
      %419 = vst.msk [vmem:[%s269 + $0x18] sm:$0xff] %vm415, %v409
      %v420 = vmul.f32 %v305, %v403
      %v421 = vmul.f32 %v310, %v405
      %v422 = vmul.f32 %v315, %v407
      %v423 = vmul.f32 %v320, %v409
      %v424 = vmul.f32 %v420, %v289
      %v425 = vmul.f32 %v421, %v289
      %v426 = vmul.f32 %v422, %v289
      %v427 = vmul.f32 %v423, %v289
      %v428 = vmul.f32 %v332, %v403
      %v429 = vmul.f32 %v336, %v405
      %v430 = vmul.f32 %v340, %v407
      %v431 = vmul.f32 %v344, %v409
      %v432 = vmul.f32 %v428, %v293
      %v433 = vmul.f32 %v429, %v293
      %v434 = vmul.f32 %v430, %v293
      %v435 = vmul.f32 %v431, %v293
      %v436 = vmul.f32 %v356, %v403
      %v437 = vmul.f32 %v360, %v405
      %v438 = vmul.f32 %v364, %v407
      %v439 = vmul.f32 %v368, %v409
      %v440 = vmul.f32 %v436, %v297
      %v441 = vmul.f32 %v437, %v297
      %v442 = vmul.f32 %v438, %v297
      %v443 = vmul.f32 %v439, %v297
      %v444 = vmul.f32 %v380, %v403
      %v445 = vmul.f32 %v384, %v405
      %v446 = vmul.f32 %v388, %v407
      %v447 = vmul.f32 %v392, %v409
      %v448 = vmul.f32 %v444, %v301
      %v449 = vmul.f32 %v445, %v301
      %v450 = vmul.f32 %v446, %v301
      %v451 = vmul.f32 %v447, %v301
      %456 = vrot.lane.b32.xlu0 %v432, 6
      %v457 = vpop.permute.xlu0 %456
      %458 = vrot.lane.b32.xlu0 %v433, 6
      %v459 = vpop.permute.xlu0 %458
      %460 = vrot.lane.b32.xlu0 %v434, 6
      %v461 = vpop.permute.xlu0 %460
      %462 = vrot.lane.b32.xlu0 %v435, 6
      %v463 = vpop.permute.xlu0 %462
      %472 = vrot.lane.b32.xlu0 %v440, 12
      %v473 = vpop.permute.xlu0 %472
      %474 = vrot.lane.b32.xlu0 %v441, 12
      %v475 = vpop.permute.xlu0 %474
      %476 = vrot.lane.b32.xlu0 %v442, 12
      %v477 = vpop.permute.xlu0 %476
      %478 = vrot.lane.b32.xlu0 %v443, 12
      %v479 = vpop.permute.xlu0 %478
      %488 = vrot.lane.b32.xlu0 %v448, 18
      %v489 = vpop.permute.xlu0 %488
      %490 = vrot.lane.b32.xlu0 %v449, 18
      %v491 = vpop.permute.xlu0 %490
      %492 = vrot.lane.b32.xlu0 %v450, 18
      %v493 = vpop.permute.xlu0 %492
      %494 = vrot.lane.b32.xlu0 %v451, 18
      %v495 = vpop.permute.xlu0 %494
      %v500 = vsel %vm415, %v424, %v457
      %v501 = vsel %vm415, %v425, %v459
      %v502 = vsel %vm415, %v426, %v461
      %v503 = vsel %vm415, %v427, %v463
      %vm504 = vcmask 97280
      %v505 = vsel %vm504, %v500, %v473
      %v506 = vsel %vm504, %v501, %v475
      %v507 = vsel %vm504, %v502, %v477
      %v508 = vsel %vm504, %v503, %v479
      %vm509 = vcmask 146432
      %v510 = vsel %vm509, %v505, %v489
      %v511 = vsel %vm509, %v506, %v491
      %v512 = vsel %vm509, %v507, %v493
      %v513 = vsel %vm509, %v508, %v495
      %vm514 = vcmask 195584
      %515 = vst.msk [vmem:[%s275] sm:$0xff] %vm514, %v510
      %516 = vst.msk [vmem:[%s275 + $0x8] sm:$0xff] %vm514, %v511
      %517 = vst.msk [vmem:[%s275 + $0x10] sm:$0xff] %vm514, %v512
      %518 = vst.msk [vmem:[%s275 + $0x18] sm:$0xff] %vm514, %v513
      %s519 = smul.u32 4, %s17
      %p520 = scmp.lt.s32.totalorder %s519, 7
      %s521 = scalar_select %p520, %s519, 7
      %s522 = smul.addr %s521, 8
      %s523 = scalar_lea.vmem %s3, %s522
      %s524 = smul.u32 4, %s17
      %p525 = scmp.lt.s32.totalorder %s524, 7
      %s526 = scalar_select %p525, %s524, 7
      %s527 = smul.addr %s526, 8
      %s528 = scalar_lea.vmem %s4, %s527
      %s529 = smul.u32 4, %s17
      %p530 = scmp.lt.s32.totalorder %s529, 7
      %s531 = scalar_select %p530, %s529, 7
      %s532 = smul.addr %s531, 8
      %s533 = scalar_lea.vmem %s5, %s532
      // Predicated region
      $region33: #{tpu_custom_call.1} parent=31 // pred_check
        %p534 = pneg %p108
      $region34: #{tpu_custom_call.1} parent=31 // pred_check_branch
        %536 = sbr.rel (%p534) target = $region36
      $region35: #{tpu_custom_call.1} parent=31 // pred_region
        %s537 = smul.u32 4, %s17
      $region36: #{tpu_custom_call.1} parent=31 // pred_fallthru
        _
      // Predicated region
      $region37: #{tpu_custom_call.1} parent=31 // pred_check
        %p538 = pneg %p134
      $region38: #{tpu_custom_call.1} parent=31 // pred_check_branch
        %540 = sbr.rel (%p538) target = $region40
      $region39: #{tpu_custom_call.1} parent=31 // pred_region
        %s541 = smul.u32 4, %s17
      $region40: #{tpu_custom_call.1} parent=31 // pred_fallthru
        _
      // Predicated region
      $region41: #{tpu_custom_call.1} parent=31 // pred_check
        %p542 = pneg %p160
      $region42: #{tpu_custom_call.1} parent=31 // pred_check_branch
        %544 = sbr.rel (%p542) target = $region44
      $region43: #{tpu_custom_call.1} parent=31 // pred_region
        %s545 = smul.u32 4, %s17
      $region44: #{tpu_custom_call.1} parent=31 // pred_fallthru
        _
    $region32: #{tpu_custom_call.1} parent=5 // pred_fallthru
      _
    %p546 = scmp.le.s32.totalorder 2, %s12
    // Predicated region
    $region45: #{tpu_custom_call.1} parent=5 // pred_check
      %p547 = pneg %p546
    $region46: #{tpu_custom_call.1} parent=5 // pred_check_branch
      %549 = sbr.rel (%p547) target = $region48
    $region47: #{tpu_custom_call.1} parent=5 // pred_region
      %s550 = ssub.s32 %s12, 2
      // Predicated region
      $region49: #{tpu_custom_call.1} parent=47 // pred_check
        %p551 = pneg %p114
      $region50: #{tpu_custom_call.1} parent=47 // pred_check_branch
        %553 = sbr.rel (%p551) target = $region52
      $region51: #{tpu_custom_call.1} parent=47 // pred_region
        %s554 = smul.u32 4, %s18
        %p555 = scmp.lt.s32.totalorder %s554, 7
        %s556 = scalar_select %p555, %s554, 7
        %s557 = smul.addr %s556, 8
        %s558 = scalar_lea.vmem %s3, %s557
      $region52: #{tpu_custom_call.1} parent=47 // pred_fallthru
        _
      // Predicated region
      $region53: #{tpu_custom_call.1} parent=47 // pred_check
        %p559 = pneg %p140
      $region54: #{tpu_custom_call.1} parent=47 // pred_check_branch
        %561 = sbr.rel (%p559) target = $region56
      $region55: #{tpu_custom_call.1} parent=47 // pred_region
        %s562 = smul.u32 4, %s18
        %p563 = scmp.lt.s32.totalorder %s562, 7
        %s564 = scalar_select %p563, %s562, 7
        %s565 = smul.addr %s564, 8
        %s566 = scalar_lea.vmem %s4, %s565
      $region56: #{tpu_custom_call.1} parent=47 // pred_fallthru
        _
      // Predicated region
      $region57: #{tpu_custom_call.1} parent=47 // pred_check
        %p567 = pneg %p166
      $region58: #{tpu_custom_call.1} parent=47 // pred_check_branch
        %569 = sbr.rel (%p567) target = $region60
      $region59: #{tpu_custom_call.1} parent=47 // pred_region
        %s570 = smul.u32 4, %s18
        %p571 = scmp.lt.s32.totalorder %s570, 7
        %s572 = scalar_select %p571, %s570, 7
        %s573 = smul.addr %s572, 8
        %s574 = scalar_lea.vmem %s5, %s573
      $region60: #{tpu_custom_call.1} parent=47 // pred_fallthru
        _
    $region48: #{tpu_custom_call.1} parent=5 // pred_fallthru
      _
  $region6: #{tpu_custom_call.1} parent=0 // loop_footer
    %s16 = sadd.s32 1, %s12
  $region7: #{tpu_custom_call.1} parent=0 // loop_footer_branch
    %11 = sbr.rel target = $region3
  $region8: #{tpu_custom_call.1} parent=0 // loop_exit
    _

</llo_original>
